<compile_context>
chip_gen: v5e
topology: v5e:2x2
jax: 0.10.0
libtpu: 0.0.40
codegen_flags: <defaults>
</compile_context>

<pallas_src>
import functools

import jax
import jax.numpy as jnp
from jax.experimental import pallas as pl
from jax.experimental.pallas import tpu as pltpu


def _round_up(v: int, m: int) -> int:
    return ((v + m - 1) // m) * m


def _pad2(a, rows, cols):
    pr, pc = rows - a.shape[0], cols - a.shape[1]
    if pr == 0 and pc == 0:
        return a
    return jnp.pad(a, ((0, pr), (0, pc)))


# ---------------------------------------------------------------------------
# Pass 1: column degrees of (adj + I)  ->  D = deg ** -0.5, row layout [1, N].
# ---------------------------------------------------------------------------
def gc_degree_kernel(adj_ref, d_row_ref, deg_acc):
    i = pl.program_id(1)  # reduction over adjacency row blocks

    @pl.when(i == 0)
    def _():
        # Start at 1: the folded identity's contribution, so the N x N eye is
        # never materialized.
        deg_acc[...] = jnp.ones_like(deg_acc)

    deg_acc[...] += jnp.sum(adj_ref[...], axis=0, keepdims=True)

    @pl.when(i == pl.num_programs(1) - 1)
    def _():
        d_row_ref[...] = jax.lax.rsqrt(deg_acc[...])  # deg ** -0.5


# ---------------------------------------------------------------------------
# Pass 2: support = x @ W + b ; rhs = D * support (pre-scaled exactly once).
# ---------------------------------------------------------------------------
def gc_affine_kernel(x_ref, w_ref, b_ref, d_ref, support_ref, rhs_ref):
    support = (
        jnp.dot(x_ref[...], w_ref[...], preferred_element_type=jnp.float32)
        + b_ref[...]
    )
    support_ref[...] = support
    rhs_ref[...] = support * d_ref[...]  # (tm, F) * (tm, 1)


# ---------------------------------------------------------------------------
# Pass 3: out = (D * ((adj + I) @ rhs) * smooth + support) / (1 + smooth),
# tiled over (row blocks, contraction blocks) with an f32 VMEM accumulator.
# ---------------------------------------------------------------------------
def gc_propagate_kernel(adj_ref, rhs_ref, d_ref, support_ref, out_ref, acc_ref,
                        *, smooth):
    k = pl.program_id(1)

    @pl.when(k == 0)
    def _():
        acc_ref[...] = jnp.zeros_like(acc_ref)

    acc_ref[...] += jnp.dot(
        adj_ref[...], rhs_ref[...], preferred_element_type=jnp.float32
    )

    @pl.when(k == pl.num_programs(1) - 1)
    def _():
        d_i = d_ref[...]        # (tm, 1)
        sup = support_ref[...]  # (tm, F)
        # Identity fold: (adj + I) @ rhs = acc + rhs_i, with rhs_i = d_i * sup.
        feat = d_i * (acc_ref[...] + d_i * sup)
        out_ref[...] = (feat * smooth + sup) / (1.0 + smooth)


def gc_withres(x, adj, w_t, b, smooth):
    """x: [N, Fin], adj: [N, N], w_t: [Fin, Fout] (transposed vs PyTorch), b: [1, Fout]."""
    n, fin = x.shape
    fout = w_t.shape[1]

    # Lane-dense padding of the feature dims; node dim padded to the tile quantum.
    fin_p = _round_up(fin, 128)
    fout_p = _round_up(fout, 128)
    if n <= 256:
        tm = tk = _round_up(n, 8)   # single block in both node dims
        n_p = tm
    else:
        tm, tk = 256, 512           # fits v7x's 64 MiB VMEM; v5e/v6e could go larger
        n_p = _round_up(n, 512)     # divisible by both tm and tk

    f32 = jnp.float32
    xp = _pad2(x.astype(f32), n_p, fin_p)
    adjp = _pad2(adj.astype(f32), n_p, n_p)   # zero pad -> padded columns get deg = 1
    wp = _pad2(w_t.astype(f32), fin_p, fout_p)
    bp = _pad2(b.astype(f32), 1, fout_p)

    def cparams(sem):
        return pltpu.CompilerParams(
            dimension_semantics=sem, vmem_limit_bytes=48 * 1024 * 1024)

    # ---- pass 1: degrees ----
    d_row = pl.pallas_call(
        gc_degree_kernel,
        out_shape=jax.ShapeDtypeStruct((1, n_p), f32),
        grid=(n_p // tm, n_p // tk),
        in_specs=[pl.BlockSpec((tk, tm), lambda j, i: (i, j))],
        out_specs=pl.BlockSpec((1, tm), lambda j, i: (0, j)),
        scratch_shapes=[pltpu.VMEM((1, tm), f32)],
        compiler_params=cparams(("parallel", "arbitrary")),
    )(adjp)
    # Trivial N-element relayout to column form for row-wise broadcasting.
    d_col = d_row.reshape(n_p, 1)

    # ---- pass 2: linear + pre-scale ----
    support, rhs = pl.pallas_call(
        gc_affine_kernel,
        out_shape=(jax.ShapeDtypeStruct((n_p, fout_p), f32),
                   jax.ShapeDtypeStruct((n_p, fout_p), f32)),
        grid=(n_p // tm,),
        in_specs=[
            pl.BlockSpec((tm, fin_p), lambda j: (j, 0)),
            pl.BlockSpec((fin_p, fout_p), lambda j: (0, 0)),
            pl.BlockSpec((1, fout_p), lambda j: (0, 0)),
            pl.BlockSpec((tm, 1), lambda j: (j, 0)),
        ],
        out_specs=(pl.BlockSpec((tm, fout_p), lambda j: (j, 0)),
                   pl.BlockSpec((tm, fout_p), lambda j: (j, 0))),
        compiler_params=cparams(("parallel",)),
    )(xp, wp, bp, d_col)

    # ---- pass 3: tiled propagation with residual ----
    out_p = pl.pallas_call(
        functools.partial(gc_propagate_kernel, smooth=float(smooth)),
        out_shape=jax.ShapeDtypeStruct((n_p, fout_p), f32),
        grid=(n_p // tm, n_p // tk),
        in_specs=[
            pl.BlockSpec((tm, tk), lambda i, k: (i, k)),      # adj
            pl.BlockSpec((tk, fout_p), lambda i, k: (k, 0)),  # rhs = D * support
            pl.BlockSpec((tm, 1), lambda i, k: (i, 0)),       # D for output rows
            pl.BlockSpec((tm, fout_p), lambda i, k: (i, 0)),  # support (residual)
        ],
        out_specs=pl.BlockSpec((tm, fout_p), lambda i, k: (i, 0)),
        scratch_shapes=[pltpu.VMEM((tm, fout_p), f32)],
        compiler_params=cparams(("parallel", "arbitrary")),
    )(adjp, rhs, d_col, support)

    return out_p[:n, :fout]


def reference(x, adj, w_t, b, smooth):
    """Pure-JAX reference mirroring the PyTorch forward."""
    support = x @ w_t + b
    n = adj.shape[0]
    a_gcn = adj + jnp.eye(n, dtype=adj.dtype)
    deg = jnp.sum(a_gcn, axis=0)
    d = jnp.power(deg, -0.5)[:, None]
    feat = a_gcn @ (support * d)
    feat = feat * d
    return (feat * smooth + support) / (1.0 + smooth)


if __name__ == "__main__":
    N, F_IN, F_OUT = 8, 32, 32
    SMOOTH = 0.5

    key = jax.random.PRNGKey(0)
    k_x, k_adj, k_w, k_b = jax.random.split(key, 4)

    x = jax.random.normal(k_x, (N, F_IN), dtype=jnp.float32)
    # Dense nonnegative adjacency (stands in for the sparse adj in PyTorch).
    adj = jax.random.uniform(k_adj, (N, N), dtype=jnp.float32)

    # Deterministic Linear init, matching nn.Linear's uniform(-1/sqrt(fin), 1/sqrt(fin)).
    bound = 1.0 / (F_IN ** 0.5)
    w = jax.random.uniform(k_w, (F_OUT, F_IN), dtype=jnp.float32,
                           minval=-bound, maxval=bound)  # PyTorch stores [out, in]
    b = jax.random.uniform(k_b, (1, F_OUT), dtype=jnp.float32,
                           minval=-bound, maxval=bound)
    w_t = w.T  # kernels consume [Fin, Fout]

    out = gc_withres(x, adj, w_t, b, SMOOTH)
    out = jax.block_until_ready(out)

    ref = reference(x, adj, w_t, b, SMOOTH)
    assert out.shape == (N, F_OUT)
    assert jnp.allclose(out, ref, atol=1e-5, rtol=1e-5), "mismatch vs reference"

    print("KERNEL_OK")
</pallas_src>

<mosaic_0001>
module attributes {stable_mosaic.version = 11 : i64} {
  func.func @gc_degree_kernel(%arg0: i32, %arg1: i32, %arg2: memref<8x8xf32, #tpu.memory_space<vmem>>, %arg3: memref<1x8xf32, #tpu.memory_space<vmem>>, %arg4: memref<1x8xf32, #tpu.memory_space<vmem>>) attributes {dimension_semantics = [#tpu.dimension_semantics<parallel>, #tpu.dimension_semantics<arbitrary>], iteration_bounds = array<i64: 1, 1>, scalar_prefetch = 0 : i64, scratch_operands = 1 : i64, tpu.core_type = #tpu.core_type<tc>, window_params = [{transform_indices = @transform_0, window_bounds = array<i64: 8, 8>}, {transform_indices = @transform_1, window_bounds = array<i64: 1, 8>}]} {
    %c0_i32 = arith.constant 0 : i32
    %0 = arith.cmpi eq, %arg1, %c0_i32 : i32
    %1 = arith.extui %0 : i1 to i32
    %c0_i32_0 = arith.constant 0 : i32
    %2 = arith.cmpi ne, %1, %c0_i32_0 : i32
    scf.if %2 {
      %cst_8 = arith.constant 1.000000e+00 : f32
      %12 = vector.broadcast %cst_8 : f32 to vector<1x8xf32>
      %c0_9 = arith.constant 0 : index
      %c0_10 = arith.constant 0 : index
      %13 = vector.load %arg4[%c0_9, %c0_10] : memref<1x8xf32, #tpu.memory_space<vmem>>, vector<1x8xf32>
      tpu.vector_store %arg4[%c0_9, %c0_10], %12 {strides = array<i32>} : memref<1x8xf32, #tpu.memory_space<vmem>>, vector<1x8xf32>,
    } else {
    }
    %c0 = arith.constant 0 : index
    %c0_1 = arith.constant 0 : index
    %3 = vector.load %arg4[%c0, %c0_1] : memref<1x8xf32, #tpu.memory_space<vmem>>, vector<1x8xf32>
    %c0_2 = arith.constant 0 : index
    %c0_3 = arith.constant 0 : index
    %4 = vector.load %arg2[%c0_2, %c0_3] : memref<8x8xf32, #tpu.memory_space<vmem>>, vector<8x8xf32>
    %cst = arith.constant dense<0.000000e+00> : vector<8xf32>
    %5 = vector.multi_reduction <add>, %4, %cst [0] : vector<8x8xf32> to vector<8xf32>
    %6 = vector.shape_cast %5 : vector<8xf32> to vector<1x8xf32>
    %7 = arith.addf %3, %6 : vector<1x8xf32>
    %c0_4 = arith.constant 0 : index
    %c0_5 = arith.constant 0 : index
    %8 = vector.load %arg4[%c0_4, %c0_5] : memref<1x8xf32, #tpu.memory_space<vmem>>, vector<1x8xf32>
    tpu.vector_store %arg4[%c0_4, %c0_5], %7 {strides = array<i32>} : memref<1x8xf32, #tpu.memory_space<vmem>>, vector<1x8xf32>,
    %c0_i32_6 = arith.constant 0 : i32
    %9 = arith.cmpi eq, %arg1, %c0_i32_6 : i32
    %10 = arith.extui %9 : i1 to i32
    %c0_i32_7 = arith.constant 0 : i32
    %11 = arith.cmpi ne, %10, %c0_i32_7 : i32
    scf.if %11 {
      %c0_8 = arith.constant 0 : index
      %c0_9 = arith.constant 0 : index
      %12 = vector.load %arg4[%c0_8, %c0_9] : memref<1x8xf32, #tpu.memory_space<vmem>>, vector<1x8xf32>
      %13 = math.rsqrt %12 : vector<1x8xf32>
      %c0_10 = arith.constant 0 : index
      %c0_11 = arith.constant 0 : index
      %14 = vector.load %arg3[%c0_10, %c0_11] : memref<1x8xf32, #tpu.memory_space<vmem>>, vector<1x8xf32>
      tpu.vector_store %arg3[%c0_10, %c0_11], %13 {strides = array<i32>} : memref<1x8xf32, #tpu.memory_space<vmem>>, vector<1x8xf32>,
    } else {
    }
    return
  }
  func.func @transform_0(%arg0: i32, %arg1: i32) -> (i32, i32) {
    %c0_i32 = arith.constant 0 : i32
    return %arg1, %arg0 : i32, i32
  }
  func.func @transform_1(%arg0: i32, %arg1: i32) -> (i32, i32) {
    %c0_i32 = arith.constant 0 : i32
    %c0_i32_0 = arith.constant 0 : i32
    return %c0_i32, %arg0 : i32, i32
  }
}

</mosaic_0001>

<llo_original>
// kernel: tpu_custom_call.1
$region0: #{tpu_custom_call.1}
  #allocation0 [shape = 'u32[]', space=smem, size = 0x4, offset = 0x4, fixed_abs, tag = 'smem constant byte address 0x4 - core index']
  #allocation1 [shape = 'u32[72,128]{1,0:T(1,128)}', space=vmem, size = 0x9000, scoped, tag = 'internal scratch']
  #allocation2 [shape = 'f32[1,8]{1,0:T(1,128)}', space=vmem, size = 0x200, scoped, tag = 'scratch operand']
  %s0 = inlined_call_operand.hbm [shape: f32[8,8], index: 0, kind: input, shape index: {}]
  %s1 = inlined_call_operand.hbm [shape: f32[1,8], index: 1, kind: output, shape index: {}]
  %s2 = sld [smem:[#allocation0]]
  $region26: #{tpu_custom_call.1} parent=0
    _
  %s4 = ssub.s32 1, %s2
  %s5 = scalar_select 0, %s4, %s2
  $region1: #{tpu_custom_call.1} parent=0
    #allocation3 [shape = 'u8[4096]{0}', space=vmem, size = 0x1000, scoped, tag = 'input window, operand 0, single buffered']
    #allocation4 [shape = 's32[1]{0}', space=sflag, size = 0x4, scoped, tag = 'scoped memory for tpu_custom_call.1']
    #allocation5 [shape = 's32[1]{0}', space=sflag, size = 0x4, scoped, tag = 'scoped memory for tpu_custom_call.1']
    #allocation6 [shape = 'u8[512]{0}', space=vmem, size = 0x400, scoped, tag = 'output window, operand 0, single buffered']
    %6 = vsyncpa [#allocation4], 0
    %7 = vsyncpa [#allocation5], 0
    // Predicated region
    $region2: #{tpu_custom_call.1} parent=1 // pred_check
      _
    $region3: #{tpu_custom_call.1} parent=1 // pred_check_branch
      %9 = sbr.rel (0) target = $region5
    $region4: #{tpu_custom_call.1} parent=1 // pred_region
      %11 = vsyncadd [#allocation4], 0
      %s13 = sshll.u32 %s0, 4
      %s14 = int_to_ptr.hbm [resolvable:$true] %s13
      %s15 = sshll.u32 [#allocation3], 4
      %s16 = int_to_ptr.vmem [resolvable:$true] %s15
      %18 = dma.hbm_to_vmem [thread:$0]  %s14, 128, %s16, [#allocation4]
    $region5: #{tpu_custom_call.1} parent=1 // pred_fallthru
      _
    // Predicated region
    $region6: #{tpu_custom_call.1} parent=1 // pred_check
      _
    $region7: #{tpu_custom_call.1} parent=1 // pred_check_branch
      %20 = sbr.rel (0) target = $region9
    $region8: #{tpu_custom_call.1} parent=1 // pred_region
      %22 = dma.done [#allocation4], 128
    $region9: #{tpu_custom_call.1} parent=1 // pred_fallthru
      _
    %p23 = scmp.eq.s32.totalorder 0, 0
    // Predicated region
    $region10: #{tpu_custom_call.1} parent=1 // pred_check
      %p24 = pneg %p23
    $region11: #{tpu_custom_call.1} parent=1 // pred_check_branch
      %26 = sbr.rel (%p24) target = $region13
    $region12: #{tpu_custom_call.1} parent=1 // pred_region
      %vm27 = vcmask 57344
      %28 = vst.msk [vmem:[#allocation2] sm:$0x1] %vm27, 1.0
    $region13: #{tpu_custom_call.1} parent=1 // pred_fallthru
      _
    %v29 = vld [vmem:[#allocation2] sm:$0x1]
    %v30 = vld [vmem:[#allocation3] sm:$0xff]
    %vm31 = vcmask 64512
    %v32 = vsel %vm31, %v30, 0.0
    %v33 = vrot.slane %v32, 4
    %v34 = vadd.f32 %v32, %v33
    %v35 = vrot.slane %v34, 2
    %v36 = vadd.f32 %v34, %v35
    %v37 = vrot.slane %v36, 1
    %v38 = vadd.f32 %v36, %v37
    %v39 = vadd.f32 %v29, %v38
    %vm40 = vcmask 57344
    %41 = vst.msk [vmem:[#allocation2] sm:$0x1] %vm40, %v39
    // Predicated region
    $region14: #{tpu_custom_call.1} parent=1 // pred_check
      %p42 = pneg %p23
    $region15: #{tpu_custom_call.1} parent=1 // pred_check_branch
      %44 = sbr.rel (%p42) target = $region17
    $region16: #{tpu_custom_call.1} parent=1 // pred_region
      %v45 = vld [vmem:[#allocation2] sm:$0x1]
      %v46 = vrsqrt.pop %v45
      %v47 = vmul.f32 %v46, %v45
      %v48 = vmul.f32 %v47, %v46
      %v49 = vmul.f32 0.5, %v48
      %v50 = vsub.f32 1.5, %v49
      %v51 = vmul.f32 %v46, %v50
      %vm52 = vweird.f32 %v45
      %vm53 = vweird.f32 %v46
      %vm54 = vmor %vm52, %vm53
      %v55 = vsel %vm54, %v46, %v51
      %56 = vst.msk [vmem:[#allocation6] sm:$0x1] %vm40, %v55
    $region17: #{tpu_custom_call.1} parent=1 // pred_fallthru
      _
    // Predicated region
    $region18: #{tpu_custom_call.1} parent=1 // pred_check
      _
    $region19: #{tpu_custom_call.1} parent=1 // pred_check_branch
      %58 = sbr.rel (0) target = $region21
    $region20: #{tpu_custom_call.1} parent=1 // pred_region
      %60 = vsyncadd [#allocation5], 0
      %s62 = sshll.u32 [#allocation6], 4
      %s63 = int_to_ptr.vmem [resolvable:$true] %s62
      %s64 = sshll.u32 %s1, 4
      %s65 = int_to_ptr.hbm [resolvable:$true] %s64
      %67 = dma.vmem_to_hbm [thread:$0]  %s63, 16, %s65, [#allocation5]
    $region21: #{tpu_custom_call.1} parent=1 // pred_fallthru
      _
    // Predicated region
    $region22: #{tpu_custom_call.1} parent=1 // pred_check
      _
    $region23: #{tpu_custom_call.1} parent=1 // pred_check_branch
      %69 = sbr.rel (0) target = $region25
    $region24: #{tpu_custom_call.1} parent=1 // pred_region
      %71 = dma.done [#allocation5], 16
    $region25: #{tpu_custom_call.1} parent=1 // pred_fallthru
      _
    %72 = vsyncpa [#allocation4], 1
    %73 = vsyncpa [#allocation5], 1

</llo_original>
